<compile_context>
chip_gen: v7x
topology: tpu7x:2x2x1
jax: 0.10.0
libtpu: 0.0.40
codegen_flags: <defaults>
</compile_context>

<pallas_src>
import jax
import jax.numpy as jnp
from jax.experimental import pallas as pl
from jax.experimental.pallas import tpu as pltpu


_MAX_LANES = 1024               # lane-dense last dim (multiple of 128)
_TARGET_BLOCK_BYTES = 4 << 20   # ~4 MiB per block


def _h_swish_kernel(x_ref, o_ref):
    x = x_ref[...]
    # h_swish(x) = x * relu6(x + 3) / 6 = x * clamp(x + 3, 0, 6) * (1/6)
    y = x * (jnp.clip(x + 3.0, 0.0, 6.0) * (1.0 / 6.0))
    if y.dtype != o_ref.dtype:
        y = y.astype(o_ref.dtype)
    o_ref[...] = y


def _round_up(a: int, b: int) -> int:
    return pl.cdiv(a, b) * b


def _pick_lanes(total: int):
    """Prefer a multiple-of-128 divisor of `total` (copy-free reshape)."""
    for lanes in (1024, 512, 256, 128):
        if total % lanes == 0:
            return lanes, False
    # No divisor: pad by at most lanes-1 elements.
    lanes = min(_MAX_LANES, _round_up(max(total, 1), 128))
    return lanes, True


def h_swish(x: jax.Array) -> jax.Array:
    """Hard swish, elementwise, matching torch's x * relu6(x + 3) / 6."""
    orig_shape = x.shape
    orig_dtype = x.dtype
    total = x.size
    itemsize = jnp.dtype(orig_dtype).itemsize
    sublane = max(8, 32 // itemsize)   # f32 -> 8, bf16 -> 16, 8-bit -> 32

    lanes, needs_pad = _pick_lanes(total)
    rows = pl.cdiv(max(total, 1), lanes)

    # Block rows: byte-sized cap (~4 MiB per block for any dtype), kept as a
    # multiple of the sublane packing so the (8,128) BlockSpec rule holds.
    row_bytes = lanes * itemsize
    cap_rows = max(sublane, (_TARGET_BLOCK_BYTES // row_bytes) // sublane * sublane)
    # Keep >= 2 grid steps when there's enough work so a v7x megacore can
    # shard the "parallel" axis across both TensorCores.
    if rows > 2 * sublane:
        cap_rows = min(cap_rows, _round_up(pl.cdiv(rows, 2), sublane))
    tile_r = min(cap_rows, _round_up(rows, sublane))
    if tile_r >= rows:
        tile_r = rows  # full-extent block dim is always legal

    flat = x.reshape(-1)
    padded_total = rows * lanes
    if needs_pad and padded_total != total:
        flat = jnp.pad(flat, (0, padded_total - total))
    x2d = flat.reshape(rows, lanes)

    grid = (pl.cdiv(rows, tile_r),)   # ragged last block handled by Pallas masking

    out = pl.pallas_call(
        _h_swish_kernel,
        out_shape=jax.ShapeDtypeStruct((rows, lanes), orig_dtype),
        grid=grid,
        in_specs=[pl.BlockSpec((tile_r, lanes), lambda i: (i, 0))],
        out_specs=pl.BlockSpec((tile_r, lanes), lambda i: (i, 0)),
        compiler_params=pltpu.CompilerParams(
            dimension_semantics=("parallel",),
            vmem_limit_bytes=32 << 20,
        ),
        cost_estimate=pl.CostEstimate(
            flops=5 * total,
            transcendentals=0,
            bytes_accessed=2 * total * itemsize,
        ),
    )(x2d)

    out_flat = out.reshape(-1)
    if needs_pad and padded_total != total:
        out_flat = out_flat[:total]
    return out_flat.reshape(orig_shape)


def _ref_h_swish(x):
    return x * (jnp.clip(x + 3.0, 0.0, 6.0) / 6.0)


if __name__ == "__main__":
    key = jax.random.PRNGKey(0)
    k0, k1 = jax.random.split(key)

    # NCHW, like the PyTorch module's typical usage (divisible / copy-free path).
    x = jax.random.normal(k0, (2, 4, 16, 16), dtype=jnp.float32) * 4.0
    y = jax.block_until_ready(h_swish(x))
    assert y.shape == x.shape and y.dtype == x.dtype
    assert jnp.allclose(y, _ref_h_swish(x), atol=1e-5, rtol=1e-5)

    # Odd-sized tensor exercising the (tiny) pad + ragged-block path.
    x2 = jax.random.normal(k1, (3, 5, 7), dtype=jnp.float32) * 4.0
    y2 = jax.block_until_ready(h_swish(x2))
    assert y2.shape == x2.shape and y2.dtype == x2.dtype
    assert jnp.allclose(y2, _ref_h_swish(x2), atol=1e-5, rtol=1e-5)

    print("KERNEL_OK")
</pallas_src>

<mosaic_0001>
module attributes {stable_mosaic.version = 11 : i64} {
  func.func @_h_swish_kernel(%arg0: i32, %arg1: memref<2x1024xf32, #tpu.memory_space<vmem>>, %arg2: memref<2x1024xf32, #tpu.memory_space<vmem>>) attributes {dimension_semantics = [#tpu.dimension_semantics<parallel>], iteration_bounds = array<i64: 1>, scalar_prefetch = 0 : i64, scratch_operands = 0 : i64, tpu.core_type = #tpu.core_type<tc>, window_params = [{transform_indices = @transform_0, window_bounds = array<i64: 2, 1024>}, {transform_indices = @transform_1, window_bounds = array<i64: 2, 1024>}]} {
    %c0 = arith.constant 0 : index
    %c0_0 = arith.constant 0 : index
    %0 = vector.load %arg1[%c0, %c0_0] : memref<2x1024xf32, #tpu.memory_space<vmem>>, vector<2x1024xf32>
    %cst = arith.constant 3.000000e+00 : f32
    %1 = vector.broadcast %cst : f32 to vector<2x1024xf32>
    %2 = arith.addf %0, %1 : vector<2x1024xf32>
    %cst_1 = arith.constant 0.000000e+00 : f32
    %cst_2 = arith.constant 6.000000e+00 : f32
    %3 = vector.broadcast %cst_1 : f32 to vector<2x1024xf32>
    %4 = arith.maximumf %3, %2 : vector<2x1024xf32>
    %5 = vector.broadcast %cst_2 : f32 to vector<2x1024xf32>
    %6 = arith.minimumf %5, %4 : vector<2x1024xf32>
    %cst_3 = arith.constant 0.166666672 : f32
    %7 = vector.broadcast %cst_3 : f32 to vector<2x1024xf32>
    %8 = arith.mulf %6, %7 : vector<2x1024xf32>
    %9 = arith.mulf %0, %8 : vector<2x1024xf32>
    %c0_4 = arith.constant 0 : index
    %c0_5 = arith.constant 0 : index
    %10 = vector.load %arg2[%c0_4, %c0_5] : memref<2x1024xf32, #tpu.memory_space<vmem>>, vector<2x1024xf32>
    tpu.vector_store %arg2[%c0_4, %c0_5], %9 {strides = array<i32>} : memref<2x1024xf32, #tpu.memory_space<vmem>>, vector<2x1024xf32>,
    return
  }
  func.func @transform_0(%arg0: i32) -> (i32, i32) {
    %c0_i32 = arith.constant 0 : i32
    %c0_i32_0 = arith.constant 0 : i32
    return %arg0, %c0_i32 : i32, i32
  }
  func.func @transform_1(%arg0: i32) -> (i32, i32) {
    %c0_i32 = arith.constant 0 : i32
    %c0_i32_0 = arith.constant 0 : i32
    return %arg0, %c0_i32 : i32, i32
  }
}

</mosaic_0001>

<llo_original>
// kernel: tpu_custom_call.1
$region0: #{tpu_custom_call.1}
  #allocation0 [shape = 'u32[]', space=smem, size = 0x4, offset = 0x4, fixed_abs, tag = 'smem constant byte address 0x4 - core index']
  #allocation1 [shape = 'u32[144,128]{1,0:T(1,128)}', space=vmem, size = 0x12000, scoped, tag = 'internal scratch']
  %s0 = inlined_call_operand.hbm [shape: f32[2,1024], index: 0, kind: input, shape index: {}]
  %s1 = inlined_call_operand.hbm [shape: f32[2,1024], index: 1, kind: output, shape index: {}]
  %s2 = sld [smem:[#allocation0]]
  $region18: #{tpu_custom_call.1} parent=0
    _
  %s4 = ssub.s32 1, %s2
  %s5 = scalar_select 0, %s4, %s2
  $region1: #{tpu_custom_call.1} parent=0
    #allocation2 [shape = 'u8[8192]{0}', space=vmem, size = 0x2000, scoped, tag = 'input window, operand 0, single buffered']
    #allocation3 [shape = 's32[1]{0}', space=sflag, size = 0x4, scoped, tag = 'scoped memory for tpu_custom_call.1']
    #allocation4 [shape = 's32[1]{0}', space=sflag, size = 0x4, scoped, tag = 'scoped memory for tpu_custom_call.1']
    #allocation5 [shape = 'u8[8192]{0}', space=vmem, size = 0x2000, scoped, tag = 'output window, operand 0, single buffered']
    %6 = vsyncpa [#allocation3], 0
    %7 = vsyncpa [#allocation4], 0
    // Predicated region
    $region2: #{tpu_custom_call.1} parent=1 // pred_check
      _
    $region3: #{tpu_custom_call.1} parent=1 // pred_check_branch
      %9 = sbr.rel (0) target = $region5
    $region4: #{tpu_custom_call.1} parent=1 // pred_region
      %s11 = ssub.s32 256, 256
      %12 = vsyncadd [#allocation3], %s11
      %s14 = sshll.u32 [#allocation2], 4
      %s15 = int_to_ptr.vmem [resolvable:$true] %s14
      %17 = dma.hbm_to_vmem [thread:$0]  %s0, 256, %s15, [#allocation3]
    $region5: #{tpu_custom_call.1} parent=1 // pred_fallthru
      _
    // Predicated region
    $region6: #{tpu_custom_call.1} parent=1 // pred_check
      _
    $region7: #{tpu_custom_call.1} parent=1 // pred_check_branch
      %19 = sbr.rel (0) target = $region9
    $region8: #{tpu_custom_call.1} parent=1 // pred_region
      %20 = dma.done [#allocation3], 256
    $region9: #{tpu_custom_call.1} parent=1 // pred_fallthru
      _
    %v21 = vld [vmem:[#allocation2] sm:$0xff]
    %v22 = vld [vmem:[#allocation2 + $0x8] sm:$0xff]
    %v23 = vadd.f32 %v21, 3.0
    %v24 = vadd.f32 %v22, 3.0
    %v25 = vmax.f32 %v23, 0.0
    %v26 = vmax.f32 %v24, 0.0
    %v27 = vmin.f32 %v25, 6.0
    %v28 = vmin.f32 %v26, 6.0
    %v29 = vmul.f32 %v27, 0.16666667
    %v30 = vmul.f32 %v28, 0.16666667
    %v31 = vmul.f32 %v21, %v29
    %v32 = vmul.f32 %v22, %v30
    %33 = vst [vmem:[#allocation5] sm:$0xff] %v31
    %34 = vst [vmem:[#allocation5 + $0x8] sm:$0xff] %v32
    // Predicated region
    $region10: #{tpu_custom_call.1} parent=1 // pred_check
      _
    $region11: #{tpu_custom_call.1} parent=1 // pred_check_branch
      %36 = sbr.rel (0) target = $region13
    $region12: #{tpu_custom_call.1} parent=1 // pred_region
      %s38 = ssub.s32 256, 256
      %39 = vsyncadd [#allocation4], %s38
      %s41 = sshll.u32 [#allocation5], 4
      %s42 = int_to_ptr.vmem [resolvable:$true] %s41
      %44 = dma.vmem_to_hbm [thread:$0]  %s42, 256, %s1, [#allocation4]
    $region13: #{tpu_custom_call.1} parent=1 // pred_fallthru
      _
    // Predicated region
    $region14: #{tpu_custom_call.1} parent=1 // pred_check
      _
    $region15: #{tpu_custom_call.1} parent=1 // pred_check_branch
      %46 = sbr.rel (0) target = $region17
    $region16: #{tpu_custom_call.1} parent=1 // pred_region
      %47 = dma.done [#allocation4], 256
    $region17: #{tpu_custom_call.1} parent=1 // pred_fallthru
      _
    %48 = vsyncpa [#allocation3], 1
    %49 = vsyncpa [#allocation4], 1

</llo_original>
